<compile_context>
chip_gen: v7x
topology: tpu7x:2x2x1
jax: 0.10.0
libtpu: 0.0.40
codegen_flags: <defaults>
</compile_context>

<pallas_src>
import functools

import jax
import jax.numpy as jnp
from jax import lax
from jax.experimental import pallas as pl
from jax.experimental.pallas import tpu as pltpu


def _logreg_kernel(x_ref, w_ref, b_ref, o_ref, *, use_bf16_mxu):
    # x_ref: (TB, n_in), w_ref: (n_out, n_in) [native PyTorch layout, resident],
    # b_ref: (1, n_out), o_ref: (TB, n_out)
    x = x_ref[...]
    w = w_ref[...]
    if use_bf16_mxu:
        # bf16 operands feed the MXU's native path on v6e/v7x; accumulate in f32.
        x = x.astype(jnp.bfloat16)
        w = w.astype(jnp.bfloat16)

    # x @ w.T without materializing a transposed weight copy:
    # contracting dims ((1,), (1,)) lets the MXU consume (n_out, n_in) directly.
    z = lax.dot_general(
        x, w, dimension_numbers=(((1,), (1,)), ((), ())),
        preferred_element_type=jnp.float32,
    )
    z = z + b_ref[...]  # f32 epilogue (broadcast bias over batch rows)

    # sigmoid = 1 / (1 + exp(-z)); exp goes to the EUP slot (free filler while
    # MXU / store slots are busy). Kept exact (no approx recip) for tolerance.
    o_ref[...] = (1.0 / (1.0 + jnp.exp(-z))).astype(o_ref.dtype)


def _pick_batch_tile(batch, n_in, n_out, *, vmem_budget_bytes=32 * 1024 * 1024):
    """Largest batch tile (multiple of 8, <=1024) whose double-buffered tiles
    plus the resident weight/bias fit in half the VMEM budget (2x headroom)."""
    elt = 4  # f32 bytes
    resident = n_out * n_in * elt + n_out * elt
    best = 8
    tb = 8
    while tb <= 1024:
        need = 2 * tb * n_in * elt + 2 * tb * n_out * elt + resident
        if need <= vmem_budget_bytes // 2:
            best = tb
        tb += 8
    if batch <= best:
        return batch  # full-dim block (valid even when batch < 8)
    return best


def logistic_regression_forward(x, weight, bias, *, block_b=None, use_bf16_mxu=False):
    """x: (B, n_in) f32; weight: (n_out, n_in) f32 (PyTorch layout); bias: (n_out,).

    Returns sigmoid(x @ weight.T + bias).reshape(-1), matching the PyTorch module.
    """
    B, n_in = x.shape
    n_out, n_in_w = weight.shape
    assert n_in_w == n_in, "weight must be (n_out, n_in)"

    if block_b is None:
        block_b = _pick_batch_tile(B, n_in, n_out)
    block_b = min(block_b, B)

    b2 = bias.reshape(1, n_out)  # 2-D bias for TPU-friendly layout
    grid = (pl.cdiv(B, block_b),)

    # Explicit VMEM limit with headroom (sized for v7x's smaller VMEM too).
    tile_bytes = (2 * block_b * n_in * 4            # double-buffered x tile
                  + 2 * block_b * n_out * 4         # double-buffered out tile
                  + n_out * n_in * 4 + n_out * 4)   # resident W + bias
    vmem_limit = min(max(4 * tile_bytes, 8 * 1024 * 1024), 32 * 1024 * 1024)

    kernel = functools.partial(_logreg_kernel, use_bf16_mxu=use_bf16_mxu)

    out = pl.pallas_call(
        kernel,
        out_shape=jax.ShapeDtypeStruct((B, n_out), jnp.float32),
        grid_spec=pltpu.PrefetchScalarGridSpec(
            num_scalar_prefetch=0,
            grid=grid,
            in_specs=[
                pl.BlockSpec((block_b, n_in), lambda i: (i, 0)),   # batch-tiled x
                pl.BlockSpec((n_out, n_in), lambda i: (0, 0)),     # resident weight
                pl.BlockSpec((1, n_out), lambda i: (0, 0)),        # resident bias
            ],
            out_specs=pl.BlockSpec((block_b, n_out), lambda i: (i, 0)),
        ),
        compiler_params=pltpu.CompilerParams(
            dimension_semantics=("parallel",),   # independent batch tiles
            vmem_limit_bytes=vmem_limit,
        ),
    )(x, weight, b2)

    # torch.sigmoid(self.linear(x)).flatten()
    return out.reshape(-1)


def reference_forward(x, weight, bias):
    return jax.nn.sigmoid(x @ weight.T + bias).reshape(-1)


if __name__ == "__main__":
    key = jax.random.PRNGKey(0)
    k_x, k_w, k_b = jax.random.split(key, 3)

    batch, n_in, n_out = 64, 32, 8

    x = jax.random.normal(k_x, (batch, n_in), dtype=jnp.float32)
    # PyTorch nn.Linear default init: U(-1/sqrt(n_in), 1/sqrt(n_in))
    bound = 1.0 / jnp.sqrt(jnp.float32(n_in))
    weight = jax.random.uniform(k_w, (n_out, n_in), jnp.float32, -bound, bound)
    bias = jax.random.uniform(k_b, (n_out,), jnp.float32, -bound, bound)

    y_ref = reference_forward(x, weight, bias)

    # f32 path (exact semantics of the PyTorch module); block_b=16 exercises a
    # multi-step pipelined grid even at this small batch.
    y = jax.block_until_ready(
        logistic_regression_forward(x, weight, bias, block_b=16))
    assert y.shape == (batch * n_out,)
    assert jnp.allclose(y, y_ref, atol=1e-5, rtol=1e-5)

    # bf16-operand MXU path (v6e/v7x fast path); sigmoid compresses the logit
    # error, so a loose absolute tolerance suffices.
    y_bf16 = jax.block_until_ready(
        logistic_regression_forward(x, weight, bias, block_b=16, use_bf16_mxu=True))
    assert jnp.allclose(y_bf16, y_ref, atol=1e-2, rtol=0)

    print("KERNEL_OK")
</pallas_src>

<mosaic_0001>
module attributes {stable_mosaic.version = 11 : i64} {
  func.func @_logreg_kernel(%arg0: i32, %arg1: memref<16x32xf32, #tpu.memory_space<vmem>>, %arg2: memref<8x32xf32, #tpu.memory_space<vmem>>, %arg3: memref<1x8xf32, #tpu.memory_space<vmem>>, %arg4: memref<16x8xf32, #tpu.memory_space<vmem>>) attributes {dimension_semantics = [#tpu.dimension_semantics<parallel>], iteration_bounds = array<i64: 4>, scalar_prefetch = 0 : i64, scratch_operands = 0 : i64, tpu.core_type = #tpu.core_type<tc>, window_params = [{transform_indices = @transform_0, window_bounds = array<i64: 16, 32>}, {pipeline_mode = #tpu.pipeline_mode<synchronous>, transform_indices = @transform_1, window_bounds = array<i64: 8, 32>}, {pipeline_mode = #tpu.pipeline_mode<synchronous>, transform_indices = @transform_2, window_bounds = array<i64: 1, 8>}, {transform_indices = @transform_3, window_bounds = array<i64: 16, 8>}]} {
    %c0 = arith.constant 0 : index
    %c0_0 = arith.constant 0 : index
    %0 = vector.load %arg1[%c0, %c0_0] : memref<16x32xf32, #tpu.memory_space<vmem>>, vector<16x32xf32>
    %c0_1 = arith.constant 0 : index
    %c0_2 = arith.constant 0 : index
    %1 = vector.load %arg2[%c0_1, %c0_2] : memref<8x32xf32, #tpu.memory_space<vmem>>, vector<8x32xf32>
    %cst = arith.constant dense<0.000000e+00> : vector<16x8xf32>
    %2 = tpu.matmul %0, %1, %cst {dimension_numbers = #tpu.dot_dimension_numbers<[1], [1], [0], [0], [0, 0, 1, 0], [], []>} : vector<16x32xf32>, vector<8x32xf32>, vector<16x8xf32> -> vector<16x8xf32>
    %c0_3 = arith.constant 0 : index
    %c0_4 = arith.constant 0 : index
    %3 = vector.load %arg3[%c0_3, %c0_4] : memref<1x8xf32, #tpu.memory_space<vmem>>, vector<1x8xf32>
    %4 = vector.broadcast %3 : vector<1x8xf32> to vector<16x8xf32>
    %5 = arith.addf %2, %4 : vector<16x8xf32>
    %cst_5 = arith.constant 0.000000e+00 : f32
    %6 = vector.broadcast %cst_5 : f32 to vector<16x8xf32>
    %7 = arith.subf %6, %5 : vector<16x8xf32>
    %8 = math.exp %7 : vector<16x8xf32>
    %cst_6 = arith.constant 1.000000e+00 : f32
    %9 = vector.broadcast %cst_6 : f32 to vector<16x8xf32>
    %10 = arith.addf %9, %8 : vector<16x8xf32>
    %cst_7 = arith.constant 1.000000e+00 : f32
    %11 = vector.broadcast %cst_7 : f32 to vector<16x8xf32>
    %12 = arith.divf %11, %10 : vector<16x8xf32>
    %c0_8 = arith.constant 0 : index
    %c0_9 = arith.constant 0 : index
    %13 = vector.load %arg4[%c0_8, %c0_9] : memref<16x8xf32, #tpu.memory_space<vmem>>, vector<16x8xf32>
    tpu.vector_store %arg4[%c0_8, %c0_9], %12 {strides = array<i32>} : memref<16x8xf32, #tpu.memory_space<vmem>>, vector<16x8xf32>,
    return
  }
  func.func @transform_0(%arg0: i32) -> (i32, i32) {
    %c0_i32 = arith.constant 0 : i32
    %c0_i32_0 = arith.constant 0 : i32
    return %arg0, %c0_i32 : i32, i32
  }
  func.func @transform_1(%arg0: i32) -> (i32, i32) {
    %c0_i32 = arith.constant 0 : i32
    %c0_i32_0 = arith.constant 0 : i32
    %c0_i32_1 = arith.constant 0 : i32
    return %c0_i32, %c0_i32_0 : i32, i32
  }
  func.func @transform_2(%arg0: i32) -> (i32, i32) {
    %c0_i32 = arith.constant 0 : i32
    %c0_i32_0 = arith.constant 0 : i32
    %c0_i32_1 = arith.constant 0 : i32
    return %c0_i32, %c0_i32_0 : i32, i32
  }
  func.func @transform_3(%arg0: i32) -> (i32, i32) {
    %c0_i32 = arith.constant 0 : i32
    %c0_i32_0 = arith.constant 0 : i32
    return %arg0, %c0_i32 : i32, i32
  }
}

</mosaic_0001>

<llo_original>
// kernel: tpu_custom_call.1
$region0: #{tpu_custom_call.1}
  #allocation0 [shape = 'u32[]', space=smem, size = 0x4, offset = 0x4, fixed_abs, tag = 'smem constant byte address 0x4 - core index']
  #allocation1 [shape = 'u32[144,128]{1,0:T(1,128)}', space=vmem, size = 0x12000, scoped, tag = 'internal scratch']
  %s0 = inlined_call_operand.vmem [shape: f32[64,32], index: 0, kind: input, shape index: {}]
  %s1 = inlined_call_operand.vmem [shape: f32[8,32], index: 1, kind: input, shape index: {}]
  %s2 = inlined_call_operand.vmem [shape: f32[1,8], index: 2, kind: input, shape index: {}]
  %s3 = inlined_call_operand.vmem [shape: f32[64,8], index: 3, kind: output, shape index: {}]
  %s4 = sld [smem:[#allocation0]]
  $region45: #{tpu_custom_call.1} parent=0
    _
  %s6 = ssub.s32 1, %s4
  %s7 = scalar_select 0, %s6, %s4
  loop: start=0, step=1, limit=6
  $region2: #{tpu_custom_call.1} parent=0 // loop_pre_header
    _
  $region3: #{tpu_custom_call.1} parent=0 // loop_header
    %s9 = sphi 0, %s13
    %p10 = scmp.ge.s32.totalorder %s9, 6
    %s19 = sphi 0, %s21
    %s22 = sphi 0, %s19
    %s23 = sphi 0, %s22
    %s39 = sphi 0, %s23
    %s43 = sphi 0, %s43
    %s45 = sphi 0, %s43
    %s46 = sphi 0, %s45
    %s60 = sphi 0, %s46
    %s64 = sphi 0, %s64
    %s66 = sphi 0, %s64
    %s67 = sphi 0, %s66
    %s81 = sphi 0, %s67
    %s87 = sphi 0, %s89
    %s90 = sphi 0, %s87
    %s91 = sphi 0, %s90
    %s107 = sphi 0, %s91
  $region4: #{tpu_custom_call.1} parent=0 // loop_header_branch
    %12 = sbr.rel (%p10) target = $region8
  $region5: #{tpu_custom_call.1} parent=0 // loop_body
    %s14 = ssub.s32 %s9, 1
    %s15 = ssub.s32 %s9, 2
    %s16 = sadd.s32 %s9, 1
    %s17 = ssub.s32 %s9, %s16
    %p18 = scmp.eq.s32.totalorder %s17, 0
    %s20 = sadd.s32 %s19, 1
    %s21 = scalar_select %p18, %s19, %s20
    %p24 = pneg %p18
    %p25 = scmp.eq.s32.totalorder %s9, 3
    %p26 = por %p24, %p25
    %p27 = scmp.ne.s32.totalorder %s19, %s22
    %p28 = scmp.eq.s32.totalorder %s9, 0
    %p29 = por %p27, %p28
    %p30 = scmp.ne.s32.totalorder %s19, %s22
    %p31 = scmp.eq.s32.totalorder %s14, 3
    %p32 = por %p30, %p31
    %p33 = scmp.ne.s32.totalorder %s22, %s23
    %p34 = scmp.eq.s32.totalorder %s14, 0
    %p35 = por %p33, %p34
    %p36 = scmp.ne.s32.totalorder %s22, %s23
    %p37 = scmp.eq.s32.totalorder %s15, 3
    %p38 = por %p36, %p37
    %p40 = scmp.ne.s32.totalorder %s23, %s39
    %p41 = scmp.eq.s32.totalorder %s15, 0
    %p42 = por %p40, %p41
    %s44 = sadd.s32 %s43, 1
    %p47 = scmp.eq.s32.totalorder %s9, 3
    %p48 = scmp.ne.s32.totalorder %s43, %s45
    %p49 = scmp.eq.s32.totalorder %s9, 0
    %p50 = por %p48, %p49
    %p51 = scmp.ne.s32.totalorder %s43, %s45
    %p52 = scmp.eq.s32.totalorder %s14, 3
    %p53 = por %p51, %p52
    %p54 = scmp.ne.s32.totalorder %s45, %s46
    %p55 = scmp.eq.s32.totalorder %s14, 0
    %p56 = por %p54, %p55
    %p57 = scmp.ne.s32.totalorder %s45, %s46
    %p58 = scmp.eq.s32.totalorder %s15, 3
    %p59 = por %p57, %p58
    %p61 = scmp.ne.s32.totalorder %s46, %s60
    %p62 = scmp.eq.s32.totalorder %s15, 0
    %p63 = por %p61, %p62
    %s65 = sadd.s32 %s64, 1
    %p68 = scmp.eq.s32.totalorder %s9, 3
    %p69 = scmp.ne.s32.totalorder %s64, %s66
    %p70 = scmp.eq.s32.totalorder %s9, 0
    %p71 = por %p69, %p70
    %p72 = scmp.ne.s32.totalorder %s64, %s66
    %p73 = scmp.eq.s32.totalorder %s14, 3
    %p74 = por %p72, %p73
    %p75 = scmp.ne.s32.totalorder %s66, %s67
    %p76 = scmp.eq.s32.totalorder %s14, 0
    %p77 = por %p75, %p76
    %p78 = scmp.ne.s32.totalorder %s66, %s67
    %p79 = scmp.eq.s32.totalorder %s15, 3
    %p80 = por %p78, %p79
    %p82 = scmp.ne.s32.totalorder %s67, %s81
    %p83 = scmp.eq.s32.totalorder %s15, 0
    %p84 = por %p82, %p83
    %s85 = ssub.s32 %s9, %s16
    %p86 = scmp.eq.s32.totalorder %s85, 0
    %s88 = sadd.s32 %s87, 1
    %s89 = scalar_select %p86, %s87, %s88
    %p92 = pneg %p86
    %p93 = scmp.eq.s32.totalorder %s9, 3
    %p94 = por %p92, %p93
    %p95 = scmp.ne.s32.totalorder %s87, %s90
    %p96 = scmp.eq.s32.totalorder %s9, 0
    %p97 = por %p95, %p96
    %p98 = scmp.ne.s32.totalorder %s87, %s90
    %p99 = scmp.eq.s32.totalorder %s14, 3
    %p100 = por %p98, %p99
    %p101 = scmp.ne.s32.totalorder %s90, %s91
    %p102 = scmp.eq.s32.totalorder %s14, 0
    %p103 = por %p101, %p102
    %p104 = scmp.ne.s32.totalorder %s90, %s91
    %p105 = scmp.eq.s32.totalorder %s15, 3
    %p106 = por %p104, %p105
    %p108 = scmp.ne.s32.totalorder %s91, %s107
    %p109 = scmp.eq.s32.totalorder %s15, 0
    %p110 = por %p108, %p109
    %p111 = scmp.le.s32.totalorder 1, %s9
    %p112 = scmp.lt.s32.totalorder %s9, 5
    %p113 = pnand %p111, %p112
    %p114 = pneg %p113
    // Predicated region
    $region9: #{tpu_custom_call.1} parent=5 // pred_check
      _
    $region10: #{tpu_custom_call.1} parent=5 // pred_check_branch
      %116 = sbr.rel (%p113) target = $region12
    $region11: #{tpu_custom_call.1} parent=5 // pred_region
      %s117 = ssub.s32 %s9, 1
      // Predicated region
      $region13: #{tpu_custom_call.1} parent=11 // pred_check
        %p118 = pneg %p56
      $region14: #{tpu_custom_call.1} parent=11 // pred_check_branch
        %120 = sbr.rel (%p118) target = $region16
      $region15: #{tpu_custom_call.1} parent=11 // pred_region
        _
      $region16: #{tpu_custom_call.1} parent=11 // pred_fallthru
        _
      // Predicated region
      $region17: #{tpu_custom_call.1} parent=11 // pred_check
        %p121 = pneg %p77
      $region18: #{tpu_custom_call.1} parent=11 // pred_check_branch
        %123 = sbr.rel (%p121) target = $region20
      $region19: #{tpu_custom_call.1} parent=11 // pred_region
        _
      $region20: #{tpu_custom_call.1} parent=11 // pred_fallthru
        _
    $region12: #{tpu_custom_call.1} parent=5 // pred_fallthru
      _
    %p124 = scmp.lt.s32.totalorder %s9, 4
    // Predicated region
    $region21: #{tpu_custom_call.1} parent=5 // pred_check
      %p125 = pneg %p124
    $region22: #{tpu_custom_call.1} parent=5 // pred_check_branch
      %127 = sbr.rel (%p125) target = $region24
    $region23: #{tpu_custom_call.1} parent=5 // pred_region
      // Predicated region
      $region25: #{tpu_custom_call.1} parent=23 // pred_check
        %p128 = pneg %p29
      $region26: #{tpu_custom_call.1} parent=23 // pred_check_branch
        %130 = sbr.rel (%p128) target = $region28
      $region27: #{tpu_custom_call.1} parent=23 // pred_region
        %s131 = smul.u32 2, %s9
        %p132 = scmp.lt.s32.totalorder %s131, 7
        %s133 = scalar_select %p132, %s131, 7
        %s134 = smul.addr %s133, 8
        %s135 = scalar_lea.vmem %s0, %s134
        %s136 = smul.u32 2, %s9
      $region28: #{tpu_custom_call.1} parent=23 // pred_fallthru
        _
    $region24: #{tpu_custom_call.1} parent=5 // pred_fallthru
      _
    %p137 = scmp.le.s32.totalorder 1, %s9
    %p138 = scmp.lt.s32.totalorder %s9, 5
    %p139 = pnand %p137, %p138
    %p140 = pneg %p139
    // Predicated region
    $region29: #{tpu_custom_call.1} parent=5 // pred_check
      _
    $region30: #{tpu_custom_call.1} parent=5 // pred_check_branch
      %142 = sbr.rel (%p139) target = $region32
    $region31: #{tpu_custom_call.1} parent=5 // pred_region
      %s143 = ssub.s32 %s9, 1
      %s144 = smul.u32 2, %s14
      %p145 = scmp.lt.s32.totalorder %s144, 7
      %s146 = scalar_select %p145, %s144, 7
      %s147 = smul.addr %s146, 8
      %s148 = scalar_lea.vmem %s0, %s147
      %p149 = pneg %p35
      %p150 = pneg %p32
      %p151 = pneg %p56
      %p152 = pneg %p53
      %p153 = pneg %p77
      %p154 = pneg %p74
      %p155 = pneg %p103
      %p156 = pneg %p100
      %s157 = smul.u32 2, %s14
      %p158 = scmp.lt.s32.totalorder %s157, 7
      %s159 = scalar_select %p158, %s157, 7
      %s160 = smul.addr %s159, 8
      %s161 = scalar_lea.vmem %s3, %s160
      %s162 = smul.u32 2, %s14
      %p163 = scmp.lt.s32.totalorder %s162, 7
      %s164 = scalar_select %p163, %s162, 7
      %s165 = smul.addr %s164, 8
      %s166 = scalar_lea.vmem %s0, %s165
      %s167 = smul.u32 2, %s14
      %s168 = smul.u32 2, %s14
      %p169 = scmp.lt.s32.totalorder %s168, 7
      %s170 = scalar_select %p169, %s168, 7
      %s171 = smul.addr %s170, 8
      %s172 = scalar_lea.vmem %s3, %s171
      %s173 = smul.u32 2, %s14
      %v174 = vld [vmem:[%s166] sm:$0xff]
      %v175 = vld [vmem:[%s166 + $0x8] sm:$0xff]
      %v176 = vld [vmem:[%s1] sm:$0xff]
      %v177 = vld [vmem:[%s2] sm:$0x1]
      %v179 = vlaneseq
      %v180 = vshrl.u32 %v179, 7
      %v181 = vsub.s32 0, %v180
      %v182 = vrot.slane %v177, %v181
      %vm184 = vcmask 261120
      %v186 = vsel %vm184, %v174, 0
      %v189 = vsel %vm184, %v175, 0
      %v192 = vsel %vm184, %v176, 0
      %194 = vmatprep.subr.mxu0 0.0
      %195 = vmatpush1.xpose.msra.mxu0 %v192
      %196 = vmatprep.subr.mxu0 0.0
      %197 = vmatpush1.xpose.msra.mxu0 0.0
      %198 = vmatprep.subr.mxu0 0.0
      %199 = vmatpush1.xpose.msra.mxu0 0.0
      %200 = vmatprep.subr.mxu0 0.0
      %201 = vmatpush1.xpose.msra.mxu0 0.0
      %202 = vmatprep.subr.mxu0 0.0
      %203 = vmatpush1.xpose.msra.mxu0 0.0
      %204 = vmatprep.subr.mxu0 0.0
      %205 = vmatpush1.xpose.msra.mxu0 0.0
      %206 = vmatprep.subr.mxu0 0.0
      %207 = vmatpush1.xpose.msra.mxu0 0.0
      %208 = vmatprep.subr.mxu0 0.0
      %209 = vmatpush1.xpose.msra.mxu0 0.0
      %210 = vmatprep.subr.mxu0 0.0
      %211 = vmatpush1.xpose.msra.mxu0 0.0
      %212 = vmatprep.subr.mxu0 0.0
      %213 = vmatpush1.xpose.msra.mxu0 0.0
      %214 = vmatprep.subr.mxu0 0.0
      %215 = vmatpush1.xpose.msra.mxu0 0.0
      %216 = vmatprep.subr.mxu0 0.0
      %217 = vmatpush1.xpose.msra.mxu0 0.0
      %218 = vmatprep.subr.mxu0 0.0
      %219 = vmatpush1.xpose.msra.mxu0 0.0
      %220 = vmatprep.subr.mxu0 0.0
      %221 = vmatpush1.xpose.msra.mxu0 0.0
      %222 = vmatprep.subr.mxu0 0.0
      %223 = vmatpush1.xpose.msra.mxu0 0.0
      %224 = vmatprep.subr.mxu0 0.0
      %225 = vmatpush1.xpose.msra.mxu0 0.0
      %226 = vmatprep.subr.mxu0 0.0
      %227 = vmatpush1.xpose.msra.mxu0 0.0
      %228 = vmatprep.subr.mxu0 0.0
      %229 = vmatpush1.xpose.msra.mxu0 0.0
      %230 = vmatprep.subr.mxu0 0.0
      %231 = vmatpush1.xpose.msra.mxu0 0.0
      %232 = vmatprep.subr.mxu0 0.0
      %233 = vmatpush1.xpose.msra.mxu0 0.0
      %234 = vmatprep.subr.mxu0 0.0
      %235 = vmatpush1.xpose.msra.mxu0 0.0
      %236 = vmatprep.subr.mxu0 0.0
      %237 = vmatpush1.xpose.msra.mxu0 0.0
      %238 = vmatprep.subr.mxu0 0.0
      %239 = vmatpush1.xpose.msra.mxu0 0.0
      %240 = vmatprep.subr.mxu0 0.0
      %241 = vmatpush1.xpose.msra.mxu0 0.0
      %242 = vmatprep.subr.mxu0 0.0
      %243 = vmatpush1.xpose.msra.mxu0 0.0
      %244 = vmatprep.subr.mxu0 0.0
      %245 = vmatpush1.xpose.msra.mxu0 0.0
      %246 = vmatprep.subr.mxu0 0.0
      %247 = vmatpush1.xpose.msra.mxu0 0.0
      %248 = vmatprep.subr.mxu0 0.0
      %249 = vmatpush1.xpose.msra.mxu0 0.0
      %250 = vmatprep.subr.mxu0 0.0
      %251 = vmatpush1.xpose.msra.mxu0 0.0
      %252 = vmatprep.subr.mxu0 0.0
      %253 = vmatpush1.xpose.msra.mxu0 0.0
      %254 = vmatprep.subr.mxu0 0.0
      %255 = vmatpush1.xpose.msra.mxu0 0.0
      %256 = vmatprep.subr.mxu0 0.0
      %257 = vmatpush1.xpose.msra.mxu0 0.0
      %258 = vmatprep.mubr.f32.mxu0 0.0
      %259 = vmatmul.mubr.f32.gmra.mrb[0].mxu0 %v186
      %v260 = vpop.f32.mrb[0].mxu0
      %v261 = vadd.f32 %v182, %v260
      %v262 = vpop.f32.mrb[0].mxu0
      %263 = vmatprep.mubr.f32.mxu0 0.0
      %264 = vmatmul.mubr.f32.gmra.mrb[0].mxu0 %v189
      %v265 = vpop.f32.mrb[0].mxu0
      %v266 = vadd.f32 %v182, %v265
      %v267 = vpop.f32.mrb[0].mxu0
      %268 = vdwg.mxu0
      %v269 = vsub.f32 0.0, %v261
      %v270 = vsub.f32 0.0, %v266
      %v271 = vmul.f32 %v269, 1.442695
      %v272 = vpow.pop %v271
      %v273 = vmul.f32 %v270, 1.442695
      %v274 = vpow.pop %v273
      %v275 = vadd.f32 %v272, 1.0
      %v276 = vadd.f32 %v274, 1.0
      %v277 = vrcp.pop %v275
      %v278 = vmul.f32 1.0, %v277
      %v279 = vrcp.pop %v276
      %v280 = vmul.f32 1.0, %v279
      %vm281 = vcmask 64512
      %282 = vst.msk [vmem:[%s172] sm:$0xff] %vm281, %v278
      %283 = vst.msk [vmem:[%s172 + $0x8] sm:$0xff] %vm281, %v280
      %s284 = smul.u32 2, %s14
      %p285 = scmp.lt.s32.totalorder %s284, 7
      %s286 = scalar_select %p285, %s284, 7
      %s287 = smul.addr %s286, 8
      %s288 = scalar_lea.vmem %s3, %s287
      // Predicated region
      $region33: #{tpu_custom_call.1} parent=31 // pred_check
        %p289 = pneg %p100
      $region34: #{tpu_custom_call.1} parent=31 // pred_check_branch
        %291 = sbr.rel (%p289) target = $region36
      $region35: #{tpu_custom_call.1} parent=31 // pred_region
        %s292 = smul.u32 2, %s14
      $region36: #{tpu_custom_call.1} parent=31 // pred_fallthru
        _
    $region32: #{tpu_custom_call.1} parent=5 // pred_fallthru
      _
    %p293 = scmp.le.s32.totalorder 2, %s9
    // Predicated region
    $region37: #{tpu_custom_call.1} parent=5 // pred_check
      %p294 = pneg %p293
    $region38: #{tpu_custom_call.1} parent=5 // pred_check_branch
      %296 = sbr.rel (%p294) target = $region40
    $region39: #{tpu_custom_call.1} parent=5 // pred_region
      %s297 = ssub.s32 %s9, 2
      // Predicated region
      $region41: #{tpu_custom_call.1} parent=39 // pred_check
        %p298 = pneg %p106
      $region42: #{tpu_custom_call.1} parent=39 // pred_check_branch
        %300 = sbr.rel (%p298) target = $region44
      $region43: #{tpu_custom_call.1} parent=39 // pred_region
        %s301 = smul.u32 2, %s15
        %p302 = scmp.lt.s32.totalorder %s301, 7
        %s303 = scalar_select %p302, %s301, 7
        %s304 = smul.addr %s303, 8
        %s305 = scalar_lea.vmem %s3, %s304
      $region44: #{tpu_custom_call.1} parent=39 // pred_fallthru
        _
    $region40: #{tpu_custom_call.1} parent=5 // pred_fallthru
      _
  $region6: #{tpu_custom_call.1} parent=0 // loop_footer
    %s13 = sadd.s32 1, %s9
  $region7: #{tpu_custom_call.1} parent=0 // loop_footer_branch
    %8 = sbr.rel target = $region3
  $region8: #{tpu_custom_call.1} parent=0 // loop_exit
    _

</llo_original>
